<compile_context>
chip_gen: v5e
topology: v5e:2x2
jax: 0.10.0
libtpu: 0.0.40
codegen_flags: <defaults>
</compile_context>

<pallas_src>
import jax
import jax.numpy as jnp
from jax.experimental import pallas as pl
from jax.experimental.pallas import tpu as pltpu

LANE = 128     # lane width: last dim of every block padded to a multiple of this
SUBLANE = 8    # f32 sublane packing: batch tile must be a multiple of this


def _round_up(n, m):
    return ((n + m - 1) // m) * m


# ---------------------------------------------------------------------------
# Kernel
# ---------------------------------------------------------------------------
def dense_mlp_kernel(x_ref, w1_ref, b1_ref, w2_ref, b2_ref, o_ref):
    """One batch tile: tanh(x @ W1 + b1) @ W2 + b2.

    MXU runs in the weight dtype (bf16 by default) with f32 accumulation; bias add
    and tanh stay in f32 (v5e-safe). The output store is full block width
    (lane-dense multiple of 128), so no masked vst.msk partial stores.
    """
    x = x_ref[...].astype(w1_ref.dtype)                       # bf16 into the MXU
    h = jnp.dot(x, w1_ref[...], preferred_element_type=jnp.float32)
    h = jnp.tanh(h + b1_ref[...])                             # f32 VPU/EUP math
    o = jnp.dot(h.astype(w2_ref.dtype), w2_ref[...],
                preferred_element_type=jnp.float32)
    o_ref[...] = (o + b2_ref[...]).astype(o_ref.dtype)
    # TODO(synk): if a bundle dump at tb>=512 shows vld/vst as the binding slot,
    # chunk the second dot over 256-row slices of h with lax.fori_loop(unroll=True).


# ---------------------------------------------------------------------------
# Capability probes / sizing helpers
# ---------------------------------------------------------------------------
_WEIGHT_PIPELINE_MODE = "unprobed"   # cached result of _weight_pipeline_mode()


def _weight_pipeline_mode():
    """pl.Buffered(1) on the constant-index weight blocks disables their double
    buffering (they are DMA'd once and stay resident), halving their VMEM cost.
    Probed once, eagerly, because not every lowering accepts pipeline_mode on a
    top-level BlockSpec; falls back to the default (double-buffered) behavior."""
    global _WEIGHT_PIPELINE_MODE
    if _WEIGHT_PIPELINE_MODE != "unprobed":
        return _WEIGHT_PIPELINE_MODE

    def _probe_kernel(x_ref, o_ref):
        o_ref[...] = x_ref[...] + 1.0

    try:
        mode = pl.Buffered(1)
        out = pl.pallas_call(
            _probe_kernel,
            out_shape=jax.ShapeDtypeStruct((SUBLANE, LANE), jnp.float32),
            grid=(1,),
            in_specs=[pl.BlockSpec((SUBLANE, LANE), lambda i: (0, 0),
                                   pipeline_mode=mode)],
            out_specs=pl.BlockSpec((SUBLANE, LANE), lambda i: (0, 0)),
        )(jnp.zeros((SUBLANE, LANE), jnp.float32))
        jax.block_until_ready(out)
        _WEIGHT_PIPELINE_MODE = mode
    except Exception:
        _WEIGHT_PIPELINE_MODE = None
    return _WEIGHT_PIPELINE_MODE


def _vmem_cap_bytes():
    """Generation-aware VMEM budget (v5e/v6e: 128 MiB physical, v7x: 64 MiB/TC)."""
    try:
        phys = pltpu.get_tpu_info().vmem_capacity_bytes
    except Exception:
        phys = 64 * 1024 * 1024            # conservative fallback (v7x per-TC VMEM)
    return min(int(0.75 * phys), 100 * 1024 * 1024)


# ---------------------------------------------------------------------------
# Parameter preparation (one-time) and forward pass
# ---------------------------------------------------------------------------
def prepare_params(w1, b1, w2, b2, *, matmul_dtype=jnp.bfloat16):
    """Pad weights/biases once (they are static) so the per-call wrapper does no
    weight data movement. Feature dims are zero-padded to multiples of 128; the
    math stays exact (padded hidden units are tanh(0)=0, padded output cols are 0).
    Weights are stored/streamed in `matmul_dtype` (bf16 feeds the MXU natively);
    biases are kept in f32 for the f32 activation math."""
    num_assets, nodes = w1.shape
    assert b1.shape == (nodes,)
    assert w2.shape == (nodes, num_assets)
    assert b2.shape == (num_assets,)
    a_pad = _round_up(max(num_assets, 1), LANE)
    n_pad = _round_up(max(nodes, 1), LANE)
    w1p = jnp.pad(w1.astype(matmul_dtype),
                  ((0, a_pad - num_assets), (0, n_pad - nodes)))
    w2p = jnp.pad(w2.astype(matmul_dtype),
                  ((0, n_pad - nodes), (0, a_pad - num_assets)))
    b1p = jnp.pad(b1.astype(jnp.float32), (0, n_pad - nodes)).reshape(1, n_pad)
    b2p = jnp.pad(b2.astype(jnp.float32), (0, a_pad - num_assets)).reshape(1, a_pad)
    return dict(
        num_assets=num_assets, nodes=nodes, a_pad=a_pad, n_pad=n_pad,
        w1=w1, b1=b1, w2=w2, b2=b2,                 # originals (small-dim jnp path)
        w1p=w1p, b1p=b1p, w2p=w2p, b2p=b2p,         # padded, MXU dtype (Pallas path)
        weight_pipeline_mode=_weight_pipeline_mode(),
    )


def dense_layer_forward(x, params, *, block_batch=512, use_pallas=None):
    """x: (B, num_assets) -> (B, num_assets). Same math as the PyTorch DenseLayer."""
    B, num_assets = x.shape
    assert num_assets == params["num_assets"]
    nodes = params["nodes"]

    if use_pallas is None:
        # Tiny feature dims (module defaults 1 / 32) would be >99% zero MXU work
        # after padding to 128 lanes; plain XLA fusion is faster there.
        use_pallas = (num_assets >= 64) and (nodes >= 64) and (B >= SUBLANE)
    if not use_pallas:
        h = jnp.tanh(x @ params["w1"] + params["b1"])
        return (h @ params["w2"] + params["b2"]).astype(x.dtype)

    a_pad, n_pad = params["a_pad"], params["n_pad"]
    w1p, b1p, w2p, b2p = params["w1p"], params["b1p"], params["w2p"], params["b2p"]
    mode = params["weight_pipeline_mode"]

    # Only per-call data movement: pad x's feature dim (no-op when 128-aligned).
    xk = x if a_pad == num_assets else jnp.pad(x, ((0, 0), (0, a_pad - num_assets)))

    # --- batch tile sizing ----------------------------------------------------
    x_item = jnp.dtype(x.dtype).itemsize
    w_item = jnp.dtype(w1p.dtype).itemsize
    n_weight_bufs = 1 if mode is not None else 2
    weight_bytes = n_weight_bufs * (
        (a_pad * n_pad + n_pad * a_pad) * w_item + (n_pad + a_pad) * 4)
    # Streamed per batch row: x tile + out tile, each double-buffered.
    stream_bytes_per_row = 2 * a_pad * x_item + 2 * a_pad * x_item

    tb = min(_round_up(block_batch, SUBLANE), _round_up(B, SUBLANE))
    if B >= 2 * SUBLANE:
        # v7x has 2 TensorCores: keep >=2 tiles on the "parallel" axis when B allows.
        tb = min(tb, _round_up(-(-B // 2), SUBLANE))
    cap = _vmem_cap_bytes()
    budget = int(0.85 * cap) - weight_bytes
    if budget > 0:
        tb_fit = (budget // stream_bytes_per_row) // SUBLANE * SUBLANE
        if tb_fit >= SUBLANE:
            tb = min(tb, tb_fit)
    tb = max(tb, SUBLANE)
    grid = (pl.cdiv(B, tb),)          # partial last block is masked by Pallas

    est = weight_bytes + tb * stream_bytes_per_row
    vmem_limit = int(min(cap, max(4 * 1024 * 1024, int(1.5 * est))))

    # --- specs ------------------------------------------------------------------
    def _resident(shape):
        # Constant index_map: DMA'd once, VMEM-resident across all batch tiles.
        if mode is None:
            return pl.BlockSpec(shape, lambda i: (0, 0))
        return pl.BlockSpec(shape, lambda i: (0, 0), pipeline_mode=mode)

    in_specs = [
        pl.BlockSpec((tb, a_pad), lambda i: (i, 0)),   # x tile streams per step
        _resident((a_pad, n_pad)),                     # W1
        _resident((1, n_pad)),                         # b1
        _resident((n_pad, a_pad)),                     # W2
        _resident((1, a_pad)),                         # b2
    ]
    out_spec = pl.BlockSpec((tb, a_pad), lambda i: (i, 0))

    out = pl.pallas_call(
        dense_mlp_kernel,
        out_shape=jax.ShapeDtypeStruct((B, a_pad), x.dtype),
        grid_spec=pltpu.PrefetchScalarGridSpec(
            num_scalar_prefetch=0,
            grid=grid,
            in_specs=in_specs,
            out_specs=out_spec,
        ),
        compiler_params=pltpu.CompilerParams(
            dimension_semantics=("parallel",),   # batch tiles independent (v7x 2-TC)
            vmem_limit_bytes=vmem_limit,
        ),
    )(xk, w1p, b1p, w2p, b2p)

    # Strip feature padding only when present (padded columns are exact zeros).
    return out if a_pad == num_assets else out[:, :num_assets]


def init_params(key, num_assets=1, nodes=32, dtype=jnp.float32):
    """Deterministic init mimicking PyTorch nn.Linear (uniform +/- 1/sqrt(fan_in)).
    Weights returned as (in_features, out_features) == transpose of PyTorch's."""
    k1, k2, k3, k4 = jax.random.split(key, 4)
    bound1 = 1.0 / jnp.sqrt(jnp.asarray(num_assets, dtype))
    bound2 = 1.0 / jnp.sqrt(jnp.asarray(nodes, dtype))
    w1 = jax.random.uniform(k1, (num_assets, nodes), dtype, -bound1, bound1)
    b1 = jax.random.uniform(k2, (nodes,), dtype, -bound1, bound1)
    w2 = jax.random.uniform(k3, (nodes, num_assets), dtype, -bound2, bound2)
    b2 = jax.random.uniform(k4, (num_assets,), dtype, -bound2, bound2)
    return w1, b1, w2, b2


if __name__ == "__main__":
    key = jax.random.PRNGKey(0)
    k_p1, k_x1, k_p2, k_x2 = jax.random.split(key, 4)

    # --- Case 1: lane-dense feature dims -> Pallas path (bf16 MXU, f32 accum). ---
    num_assets, nodes, batch = 128, 256, 200            # batch chosen to exercise the
    w1, b1, w2, b2 = init_params(k_p1, num_assets=num_assets, nodes=nodes)
    params = prepare_params(w1, b1, w2, b2)             # bf16 weights (default)
    x = jax.random.normal(k_x1, (batch, num_assets), jnp.float32)

    out = dense_layer_forward(x, params)                # partial last batch block
    jax.block_until_ready(out)
    assert out.shape == (batch, num_assets)

    # Reference mirroring the kernel's bf16 MXU inputs with f32 accumulation.
    bf, f32 = jnp.bfloat16, jnp.float32
    h_ref = jnp.tanh(x.astype(bf).astype(f32) @ w1.astype(bf).astype(f32) + b1)
    ref = h_ref.astype(bf).astype(f32) @ w2.astype(bf).astype(f32) + b2
    assert jnp.allclose(out, ref, atol=1e-2, rtol=1e-2), \
        float(jnp.max(jnp.abs(out - ref)))

    # --- Case 2: module-default tiny dims, Pallas path forced, f32 weights. ---
    na2, nd2, b2sz = 1, 32, 8
    w1s, b1s, w2s, b2s = init_params(k_p2, num_assets=na2, nodes=nd2)
    params_s = prepare_params(w1s, b1s, w2s, b2s, matmul_dtype=jnp.float32)
    xs = jax.random.normal(k_x2, (b2sz, na2), jnp.float32)

    out_s = dense_layer_forward(xs, params_s, use_pallas=True)
    jax.block_until_ready(out_s)
    ref_s = jnp.tanh(xs @ w1s + b1s) @ w2s + b2s
    assert out_s.shape == (b2sz, na2)
    assert jnp.allclose(out_s, ref_s, atol=1e-4, rtol=1e-4)

    # --- Case 3: auto dispatch picks the fused-jnp path for tiny feature dims. ---
    out_auto = dense_layer_forward(xs, params_s)        # use_pallas=None -> jnp path
    jax.block_until_ready(out_auto)
    assert jnp.allclose(out_auto, ref_s, atol=1e-5, rtol=1e-5)

    print("KERNEL_OK")
</pallas_src>

<mosaic_0001>
module attributes {stable_mosaic.version = 11 : i64} {
  func.func @_probe_kernel(%arg0: i32, %arg1: memref<8x128xf32, #tpu.memory_space<vmem>>, %arg2: memref<8x128xf32, #tpu.memory_space<vmem>>) attributes {dimension_semantics = [#tpu.dimension_semantics<arbitrary>], iteration_bounds = array<i64: 1>, scalar_prefetch = 0 : i64, scratch_operands = 0 : i64, tpu.core_type = #tpu.core_type<tc>, window_params = [{pipeline_mode = #tpu.pipeline_mode<synchronous>, transform_indices = @transform_0, window_bounds = array<i64: 8, 128>}, {pipeline_mode = #tpu.pipeline_mode<synchronous>, transform_indices = @transform_1, window_bounds = array<i64: 8, 128>}]} {
    %c0 = arith.constant 0 : index
    %c0_0 = arith.constant 0 : index
    %0 = vector.load %arg1[%c0, %c0_0] : memref<8x128xf32, #tpu.memory_space<vmem>>, vector<8x128xf32>
    %cst = arith.constant 1.000000e+00 : f32
    %1 = vector.broadcast %cst : f32 to vector<8x128xf32>
    %2 = arith.addf %0, %1 : vector<8x128xf32>
    %c0_1 = arith.constant 0 : index
    %c0_2 = arith.constant 0 : index
    %3 = vector.load %arg2[%c0_1, %c0_2] : memref<8x128xf32, #tpu.memory_space<vmem>>, vector<8x128xf32>
    tpu.vector_store %arg2[%c0_1, %c0_2], %2 {strides = array<i32>} : memref<8x128xf32, #tpu.memory_space<vmem>>, vector<8x128xf32>,
    return
  }
  func.func @transform_0(%arg0: i32) -> (i32, i32) {
    %c0_i32 = arith.constant 0 : i32
    %c0_i32_0 = arith.constant 0 : i32
    %c0_i32_1 = arith.constant 0 : i32
    return %c0_i32, %c0_i32_0 : i32, i32
  }
  func.func @transform_1(%arg0: i32) -> (i32, i32) {
    %c0_i32 = arith.constant 0 : i32
    %c0_i32_0 = arith.constant 0 : i32
    %c0_i32_1 = arith.constant 0 : i32
    return %c0_i32, %c0_i32_0 : i32, i32
  }
}

module attributes {stable_mosaic.version = 11 : i64} {
  func.func @dense_mlp_kernel(%arg0: i32, %arg1: memref<104x128xf32, #tpu.memory_space<vmem>>, %arg2: memref<128x256xbf16, #tpu.memory_space<vmem>>, %arg3: memref<1x256xf32, #tpu.memory_space<vmem>>, %arg4: memref<256x128xbf16, #tpu.memory_space<vmem>>, %arg5: memref<1x128xf32, #tpu.memory_space<vmem>>, %arg6: memref<104x128xf32, #tpu.memory_space<vmem>>) attributes {dimension_semantics = [#tpu.dimension_semantics<parallel>], iteration_bounds = array<i64: 2>, scalar_prefetch = 0 : i64, scratch_operands = 0 : i64, tpu.core_type = #tpu.core_type<tc>, window_params = [{transform_indices = @transform_0, window_bounds = array<i64: 104, 128>}, {pipeline_mode = #tpu.pipeline_mode<synchronous>, transform_indices = @transform_1, window_bounds = array<i64: 128, 256>}, {pipeline_mode = #tpu.pipeline_mode<synchronous>, transform_indices = @transform_2, window_bounds = array<i64: 1, 256>}, {pipeline_mode = #tpu.pipeline_mode<synchronous>, transform_indices = @transform_3, window_bounds = array<i64: 256, 128>}, {pipeline_mode = #tpu.pipeline_mode<synchronous>, transform_indices = @transform_4, window_bounds = array<i64: 1, 128>}, {transform_indices = @transform_5, window_bounds = array<i64: 104, 128>}]} {
    %c0 = arith.constant 0 : index
    %c0_0 = arith.constant 0 : index
    %0 = vector.load %arg1[%c0, %c0_0] : memref<104x128xf32, #tpu.memory_space<vmem>>, vector<104x128xf32>
    %1 = arith.truncf %0 : vector<104x128xf32> to vector<104x128xbf16>
    %c0_1 = arith.constant 0 : index
    %c0_2 = arith.constant 0 : index
    %2 = vector.load %arg2[%c0_1, %c0_2] : memref<128x256xbf16, #tpu.memory_space<vmem>>, vector<128x256xbf16>
    %cst = arith.constant dense<0.000000e+00> : vector<104x256xf32>
    %3 = tpu.matmul %1, %2, %cst {dimension_numbers = #tpu.dot_dimension_numbers<[1], [0], [0], [1], [0, 0, 1, 1], [], []>} : vector<104x128xbf16>, vector<128x256xbf16>, vector<104x256xf32> -> vector<104x256xf32>
    %c0_3 = arith.constant 0 : index
    %c0_4 = arith.constant 0 : index
    %4 = vector.load %arg3[%c0_3, %c0_4] : memref<1x256xf32, #tpu.memory_space<vmem>>, vector<1x256xf32>
    %5 = vector.broadcast %4 : vector<1x256xf32> to vector<104x256xf32>
    %6 = arith.addf %3, %5 : vector<104x256xf32>
    %7 = math.tanh %6 : vector<104x256xf32>
    %8 = arith.truncf %7 : vector<104x256xf32> to vector<104x256xbf16>
    %c0_5 = arith.constant 0 : index
    %c0_6 = arith.constant 0 : index
    %9 = vector.load %arg4[%c0_5, %c0_6] : memref<256x128xbf16, #tpu.memory_space<vmem>>, vector<256x128xbf16>
    %cst_7 = arith.constant dense<0.000000e+00> : vector<104x128xf32>
    %10 = tpu.matmul %8, %9, %cst_7 {dimension_numbers = #tpu.dot_dimension_numbers<[1], [0], [0], [1], [0, 0, 1, 1], [], []>} : vector<104x256xbf16>, vector<256x128xbf16>, vector<104x128xf32> -> vector<104x128xf32>
    %c0_8 = arith.constant 0 : index
    %c0_9 = arith.constant 0 : index
    %11 = vector.load %arg5[%c0_8, %c0_9] : memref<1x128xf32, #tpu.memory_space<vmem>>, vector<1x128xf32>
    %12 = vector.broadcast %11 : vector<1x128xf32> to vector<104x128xf32>
    %13 = arith.addf %10, %12 : vector<104x128xf32>
    %c0_10 = arith.constant 0 : index
    %c0_11 = arith.constant 0 : index
    %14 = vector.load %arg6[%c0_10, %c0_11] : memref<104x128xf32, #tpu.memory_space<vmem>>, vector<104x128xf32>
    tpu.vector_store %arg6[%c0_10, %c0_11], %13 {strides = array<i32>} : memref<104x128xf32, #tpu.memory_space<vmem>>, vector<104x128xf32>,
    return
  }
  func.func @transform_0(%arg0: i32) -> (i32, i32) {
    %c0_i32 = arith.constant 0 : i32
    %c0_i32_0 = arith.constant 0 : i32
    return %arg0, %c0_i32 : i32, i32
  }
  func.func @transform_1(%arg0: i32) -> (i32, i32) {
    %c0_i32 = arith.constant 0 : i32
    %c0_i32_0 = arith.constant 0 : i32
    %c0_i32_1 = arith.constant 0 : i32
    return %c0_i32, %c0_i32_0 : i32, i32
  }
  func.func @transform_2(%arg0: i32) -> (i32, i32) {
    %c0_i32 = arith.constant 0 : i32
    %c0_i32_0 = arith.constant 0 : i32
    %c0_i32_1 = arith.constant 0 : i32
    return %c0_i32, %c0_i32_0 : i32, i32
  }
  func.func @transform_3(%arg0: i32) -> (i32, i32) {
    %c0_i32 = arith.constant 0 : i32
    %c0_i32_0 = arith.constant 0 : i32
    %c0_i32_1 = arith.constant 0 : i32
    return %c0_i32, %c0_i32_0 : i32, i32
  }
  func.func @transform_4(%arg0: i32) -> (i32, i32) {
    %c0_i32 = arith.constant 0 : i32
    %c0_i32_0 = arith.constant 0 : i32
    %c0_i32_1 = arith.constant 0 : i32
    return %c0_i32, %c0_i32_0 : i32, i32
  }
  func.func @transform_5(%arg0: i32) -> (i32, i32) {
    %c0_i32 = arith.constant 0 : i32
    %c0_i32_0 = arith.constant 0 : i32
    return %arg0, %c0_i32 : i32, i32
  }
}

</mosaic_0001>

<llo_original>
// kernel: tpu_custom_call.1
$region0: #{tpu_custom_call.1}
  #allocation0 [shape = 'u32[]', space=smem, size = 0x4, offset = 0x4, fixed_abs, tag = 'smem constant byte address 0x4 - core index']
  #allocation1 [shape = 'u32[72,128]{1,0:T(1,128)}', space=vmem, size = 0x9000, scoped, tag = 'internal scratch']
  %s0 = inlined_call_operand.hbm [shape: f32[8,128], index: 0, kind: input, shape index: {}]
  %s1 = inlined_call_operand.hbm [shape: f32[8,128], index: 1, kind: output, shape index: {}]
  %s2 = sld [smem:[#allocation0]]
  $region18: #{tpu_custom_call.1} parent=0
    _
  %s4 = ssub.s32 1, %s2
  %s5 = scalar_select 0, %s4, %s2
  $region1: #{tpu_custom_call.1} parent=0
    #allocation2 [shape = 'u8[4096]{0}', space=vmem, size = 0x1000, scoped, tag = 'input window, operand 0, single buffered']
    #allocation3 [shape = 's32[1]{0}', space=sflag, size = 0x4, scoped, tag = 'scoped memory for tpu_custom_call.1']
    #allocation4 [shape = 's32[1]{0}', space=sflag, size = 0x4, scoped, tag = 'scoped memory for tpu_custom_call.1']
    #allocation5 [shape = 'u8[4096]{0}', space=vmem, size = 0x1000, scoped, tag = 'output window, operand 0, single buffered']
    %6 = vsyncpa [#allocation3], 0
    %7 = vsyncpa [#allocation4], 0
    // Predicated region
    $region2: #{tpu_custom_call.1} parent=1 // pred_check
      _
    $region3: #{tpu_custom_call.1} parent=1 // pred_check_branch
      %9 = sbr.rel (0) target = $region5
    $region4: #{tpu_custom_call.1} parent=1 // pred_region
      %11 = vsyncadd [#allocation3], 0
      %s13 = sshll.u32 %s0, 4
      %s14 = int_to_ptr.hbm [resolvable:$true] %s13
      %s15 = sshll.u32 [#allocation2], 4
      %s16 = int_to_ptr.vmem [resolvable:$true] %s15
      %18 = dma.hbm_to_vmem [thread:$0]  %s14, 128, %s16, [#allocation3]
    $region5: #{tpu_custom_call.1} parent=1 // pred_fallthru
      _
    // Predicated region
    $region6: #{tpu_custom_call.1} parent=1 // pred_check
      _
    $region7: #{tpu_custom_call.1} parent=1 // pred_check_branch
      %20 = sbr.rel (0) target = $region9
    $region8: #{tpu_custom_call.1} parent=1 // pred_region
      %22 = dma.done [#allocation3], 128
    $region9: #{tpu_custom_call.1} parent=1 // pred_fallthru
      _
    %v23 = vld [vmem:[#allocation2] sm:$0xff]
    %v24 = vadd.f32 %v23, 1.0
    %25 = vst [vmem:[#allocation5] sm:$0xff] %v24
    // Predicated region
    $region10: #{tpu_custom_call.1} parent=1 // pred_check
      _
    $region11: #{tpu_custom_call.1} parent=1 // pred_check_branch
      %27 = sbr.rel (0) target = $region13
    $region12: #{tpu_custom_call.1} parent=1 // pred_region
      %29 = vsyncadd [#allocation4], 0
      %s31 = sshll.u32 [#allocation5], 4
      %s32 = int_to_ptr.vmem [resolvable:$true] %s31
      %s33 = sshll.u32 %s1, 4
      %s34 = int_to_ptr.hbm [resolvable:$true] %s33
      %36 = dma.vmem_to_hbm [thread:$0]  %s32, 128, %s34, [#allocation4]
    $region13: #{tpu_custom_call.1} parent=1 // pred_fallthru
      _
    // Predicated region
    $region14: #{tpu_custom_call.1} parent=1 // pred_check
      _
    $region15: #{tpu_custom_call.1} parent=1 // pred_check_branch
      %38 = sbr.rel (0) target = $region17
    $region16: #{tpu_custom_call.1} parent=1 // pred_region
      %40 = dma.done [#allocation4], 128
    $region17: #{tpu_custom_call.1} parent=1 // pred_fallthru
      _
    %41 = vsyncpa [#allocation3], 1
    %42 = vsyncpa [#allocation4], 1

// kernel: tpu_custom_call.1
$region0: #{tpu_custom_call.1}
  #allocation0 [shape = 'u32[]', space=smem, size = 0x4, offset = 0x4, fixed_abs, tag = 'smem constant byte address 0x4 - core index']
  #allocation1 [shape = 'u32[72,128]{1,0:T(1,128)}', space=vmem, size = 0x9000, scoped, tag = 'internal scratch']
  %s0 = inlined_call_operand.hbm [shape: f32[200,128], index: 0, kind: input, shape index: {}]
  %s1 = inlined_call_operand.hbm [shape: bf16[128,256], index: 1, kind: input, shape index: {}]
  %s2 = inlined_call_operand.hbm [shape: f32[1,256], index: 2, kind: input, shape index: {}]
  %s3 = inlined_call_operand.hbm [shape: bf16[256,128], index: 3, kind: input, shape index: {}]
  %s4 = inlined_call_operand.vmem [shape: f32[1,128], index: 4, kind: input, shape index: {}]
  %s5 = inlined_call_operand.hbm [shape: f32[200,128], index: 5, kind: output, shape index: {}]
  %s6 = sld [smem:[#allocation0]]
  $region69: #{tpu_custom_call.1} parent=0
    _
  %s8 = ssub.s32 1, %s6
  %s9 = scalar_select 0, %s8, %s6
  $region1: #{tpu_custom_call.1} parent=0
    #allocation2 [shape = 'u8[106496]{0}', space=vmem, size = 0x1a000, scoped, tag = 'input window, operand 0']
    #allocation3 [shape = 's32[2]{0}', space=sflag, size = 0x8, scoped, tag = 'scoped memory for tpu_custom_call.1']
    #allocation4 [shape = 's32[2]{0}', space=sflag, size = 0x8, scoped, tag = 'scoped memory for tpu_custom_call.1']
    #allocation5 [shape = 'u8[65536]{0}', space=vmem, size = 0x10000, scoped, tag = 'input window, operand 1, single buffered']
    #allocation6 [shape = 's32[1]{0}', space=sflag, size = 0x4, scoped, tag = 'scoped memory for tpu_custom_call.1']
    #allocation7 [shape = 'u8[1024]{0}', space=vmem, size = 0x400, scoped, tag = 'input window, operand 2, single buffered']
    #allocation8 [shape = 'u8[65536]{0}', space=vmem, size = 0x10000, scoped, tag = 'input window, operand 3, single buffered']
    #allocation9 [shape = 's32[1]{0}', space=sflag, size = 0x4, scoped, tag = 'scoped memory for tpu_custom_call.1']
    #allocation10 [shape = 'u8[106496]{0}', space=vmem, size = 0x1a000, scoped, tag = 'output window, operand 0']
    %10 = vsyncpa [#allocation3], 0
    %s11 = scalar_lea.sflag [#allocation3], 1
    %12 = vsyncpa %s11, 0
    %13 = vsyncpa [#allocation6], 0
    %14 = vsyncpa [#allocation9], 0
    %15 = vsyncpa [#allocation4], 0
    %s16 = scalar_lea.sflag [#allocation4], 1
    %17 = vsyncpa %s16, 0
    loop: start=0, step=1, limit=4
    $region2: #{tpu_custom_call.1} parent=1 // loop_pre_header
      _
    $region3: #{tpu_custom_call.1} parent=1 // loop_header
      %s19 = sphi 0, %s23
      %p20 = scmp.ge.s32.totalorder %s19, 4
      %s29 = sphi 0, %s31
      %s32 = sphi 0, %s29
      %s33 = sphi 0, %s32
      %s49 = sphi 0, %s33
      %s53 = sphi 0, %s53
      %s55 = sphi 0, %s53
      %s56 = sphi 0, %s55
      %s70 = sphi 0, %s56
      %s74 = sphi 0, %s74
      %s76 = sphi 0, %s74
      %s77 = sphi 0, %s76
      %s91 = sphi 0, %s77
      %s95 = sphi 0, %s95
      %s97 = sphi 0, %s95
      %s98 = sphi 0, %s97
      %s112 = sphi 0, %s98
      %s116 = sphi 0, %s116
      %s118 = sphi 0, %s116
      %s119 = sphi 0, %s118
      %s133 = sphi 0, %s119
      %s139 = sphi 0, %s141
      %s142 = sphi 0, %s139
      %s143 = sphi 0, %s142
      %s159 = sphi 0, %s143
    $region4: #{tpu_custom_call.1} parent=1 // loop_header_branch
      %22 = sbr.rel (%p20) target = $region8
    $region5: #{tpu_custom_call.1} parent=1 // loop_body
      %s24 = ssub.s32 %s19, 1
      %s25 = ssub.s32 %s19, 2
      %s26 = sadd.s32 %s19, 1
      %s27 = ssub.s32 %s19, %s26
      %p28 = scmp.eq.s32.totalorder %s27, 0
      %s30 = sadd.s32 %s29, 1
      %s31 = scalar_select %p28, %s29, %s30
      %p34 = pneg %p28
      %p35 = scmp.eq.s32.totalorder %s19, 1
      %p36 = por %p34, %p35
      %p37 = scmp.ne.s32.totalorder %s29, %s32
      %p38 = scmp.eq.s32.totalorder %s19, 0
      %p39 = por %p37, %p38
      %p40 = scmp.ne.s32.totalorder %s29, %s32
      %p41 = scmp.eq.s32.totalorder %s24, 1
      %p42 = por %p40, %p41
      %p43 = scmp.ne.s32.totalorder %s32, %s33
      %p44 = scmp.eq.s32.totalorder %s24, 0
      %p45 = por %p43, %p44
      %p46 = scmp.ne.s32.totalorder %s32, %s33
      %p47 = scmp.eq.s32.totalorder %s25, 1
      %p48 = por %p46, %p47
      %p50 = scmp.ne.s32.totalorder %s33, %s49
      %p51 = scmp.eq.s32.totalorder %s25, 0
      %p52 = por %p50, %p51
      %s54 = sadd.s32 %s53, 1
      %p57 = scmp.eq.s32.totalorder %s19, 1
      %p58 = scmp.ne.s32.totalorder %s53, %s55
      %p59 = scmp.eq.s32.totalorder %s19, 0
      %p60 = por %p58, %p59
      %p61 = scmp.ne.s32.totalorder %s53, %s55
      %p62 = scmp.eq.s32.totalorder %s24, 1
      %p63 = por %p61, %p62
      %p64 = scmp.ne.s32.totalorder %s55, %s56
      %p65 = scmp.eq.s32.totalorder %s24, 0
      %p66 = por %p64, %p65
      %p67 = scmp.ne.s32.totalorder %s55, %s56
      %p68 = scmp.eq.s32.totalorder %s25, 1
      %p69 = por %p67, %p68
      %p71 = scmp.ne.s32.totalorder %s56, %s70
      %p72 = scmp.eq.s32.totalorder %s25, 0
      %p73 = por %p71, %p72
      %s75 = sadd.s32 %s74, 1
      %p78 = scmp.eq.s32.totalorder %s19, 1
      %p79 = scmp.ne.s32.totalorder %s74, %s76
      %p80 = scmp.eq.s32.totalorder %s19, 0
      %p81 = por %p79, %p80
      %p82 = scmp.ne.s32.totalorder %s74, %s76
      %p83 = scmp.eq.s32.totalorder %s24, 1
      %p84 = por %p82, %p83
      %p85 = scmp.ne.s32.totalorder %s76, %s77
      %p86 = scmp.eq.s32.totalorder %s24, 0
      %p87 = por %p85, %p86
      %p88 = scmp.ne.s32.totalorder %s76, %s77
      %p89 = scmp.eq.s32.totalorder %s25, 1
      %p90 = por %p88, %p89
      %p92 = scmp.ne.s32.totalorder %s77, %s91
      %p93 = scmp.eq.s32.totalorder %s25, 0
      %p94 = por %p92, %p93
      %s96 = sadd.s32 %s95, 1
      %p99 = scmp.eq.s32.totalorder %s19, 1
      %p100 = scmp.ne.s32.totalorder %s95, %s97
      %p101 = scmp.eq.s32.totalorder %s19, 0
      %p102 = por %p100, %p101
      %p103 = scmp.ne.s32.totalorder %s95, %s97
      %p104 = scmp.eq.s32.totalorder %s24, 1
      %p105 = por %p103, %p104
      %p106 = scmp.ne.s32.totalorder %s97, %s98
      %p107 = scmp.eq.s32.totalorder %s24, 0
      %p108 = por %p106, %p107
      %p109 = scmp.ne.s32.totalorder %s97, %s98
      %p110 = scmp.eq.s32.totalorder %s25, 1
      %p111 = por %p109, %p110
      %p113 = scmp.ne.s32.totalorder %s98, %s112
      %p114 = scmp.eq.s32.totalorder %s25, 0
      %p115 = por %p113, %p114
      %s117 = sadd.s32 %s116, 1
      %p120 = scmp.eq.s32.totalorder %s19, 1
      %p121 = scmp.ne.s32.totalorder %s116, %s118
      %p122 = scmp.eq.s32.totalorder %s19, 0
      %p123 = por %p121, %p122
      %p124 = scmp.ne.s32.totalorder %s116, %s118
      %p125 = scmp.eq.s32.totalorder %s24, 1
      %p126 = por %p124, %p125
      %p127 = scmp.ne.s32.totalorder %s118, %s119
      %p128 = scmp.eq.s32.totalorder %s24, 0
      %p129 = por %p127, %p128
      %p130 = scmp.ne.s32.totalorder %s118, %s119
      %p131 = scmp.eq.s32.totalorder %s25, 1
      %p132 = por %p130, %p131
      %p134 = scmp.ne.s32.totalorder %s119, %s133
      %p135 = scmp.eq.s32.totalorder %s25, 0
      %p136 = por %p134, %p135
      %s137 = ssub.s32 %s19, %s26
      %p138 = scmp.eq.s32.totalorder %s137, 0
      %s140 = sadd.s32 %s139, 1
      %s141 = scalar_select %p138, %s139, %s140
      %p144 = pneg %p138
      %p145 = scmp.eq.s32.totalorder %s19, 1
      %p146 = por %p144, %p145
      %p147 = scmp.ne.s32.totalorder %s139, %s142
      %p148 = scmp.eq.s32.totalorder %s19, 0
      %p149 = por %p147, %p148
      %p150 = scmp.ne.s32.totalorder %s139, %s142
      %p151 = scmp.eq.s32.totalorder %s24, 1
      %p152 = por %p150, %p151
      %p153 = scmp.ne.s32.totalorder %s142, %s143
      %p154 = scmp.eq.s32.totalorder %s24, 0
      %p155 = por %p153, %p154
      %p156 = scmp.ne.s32.totalorder %s142, %s143
      %p157 = scmp.eq.s32.totalorder %s25, 1
      %p158 = por %p156, %p157
      %p160 = scmp.ne.s32.totalorder %s143, %s159
      %p161 = scmp.eq.s32.totalorder %s25, 0
      %p162 = por %p160, %p161
      %p163 = scmp.le.s32.totalorder 1, %s19
      %p164 = scmp.lt.s32.totalorder %s19, 3
      %p165 = pnand %p163, %p164
      %p166 = pneg %p165
      // Predicated region
      $region9: #{tpu_custom_call.1} parent=5 // pred_check
        _
      $region10: #{tpu_custom_call.1} parent=5 // pred_check_branch
        %168 = sbr.rel (%p165) target = $region12
      $region11: #{tpu_custom_call.1} parent=5 // pred_region
        %s169 = ssub.s32 %s19, 1
        // Predicated region
        $region13: #{tpu_custom_call.1} parent=11 // pred_check
          %p170 = pneg %p66
        $region14: #{tpu_custom_call.1} parent=11 // pred_check_branch
          %172 = sbr.rel (%p170) target = $region16
        $region15: #{tpu_custom_call.1} parent=11 // pred_region
          %174 = vsyncadd [#allocation6], 0
          %s175 = sshll.u32 %s1, 4
          %s176 = int_to_ptr.hbm [resolvable:$true] %s175
          %s177 = sshll.u32 [#allocation5], 4
          %s178 = int_to_ptr.vmem [resolvable:$true] %s177
          %183 = dma.hbm_to_vmem [thread:$0]  %s176, 2048, %s178, [#allocation6], 128, 128, 8
        $region16: #{tpu_custom_call.1} parent=11 // pred_fallthru
          _
        // Predicated region
        $region17: #{tpu_custom_call.1} parent=11 // pred_check
          %p184 = pneg %p87
        $region18: #{tpu_custom_call.1} parent=11 // pred_check_branch
          %186 = sbr.rel (%p184) target = $region20
        $region19: #{tpu_custom_call.1} parent=11 // pred_region
          %188 = vsyncadd [#allocation6], 0
          %s190 = sshll.u32 %s2, 4
          %s191 = int_to_ptr.hbm [resolvable:$true] %s190
          %s192 = sshll.u32 [#allocation7], 4
          %s193 = int_to_ptr.vmem [resolvable:$true] %s192
          %195 = dma.hbm_to_vmem [thread:$0]  %s191, 32, %s193, [#allocation6]
        $region20: #{tpu_custom_call.1} parent=11 // pred_fallthru
          _
        // Predicated region
        $region21: #{tpu_custom_call.1} parent=11 // pred_check
          %p196 = pneg %p108
        $region22: #{tpu_custom_call.1} parent=11 // pred_check_branch
          %198 = sbr.rel (%p196) target = $region24
        $region23: #{tpu_custom_call.1} parent=11 // pred_region
          %200 = vsyncadd [#allocation9], 0
          %s201 = sshll.u32 %s3, 4
          %s202 = int_to_ptr.hbm [resolvable:$true] %s201
          %s203 = sshll.u32 [#allocation8], 4
          %s204 = int_to_ptr.vmem [resolvable:$true] %s203
          %209 = dma.hbm_to_vmem [thread:$0]  %s202, 2048, %s204, [#allocation9], 64, 64, 4
        $region24: #{tpu_custom_call.1} parent=11 // pred_fallthru
          _
        // Predicated region
        $region25: #{tpu_custom_call.1} parent=11 // pred_check
          %p210 = pneg %p129
        $region26: #{tpu_custom_call.1} parent=11 // pred_check_branch
          %212 = sbr.rel (%p210) target = $region28
        $region27: #{tpu_custom_call.1} parent=11 // pred_region
          _
        $region28: #{tpu_custom_call.1} parent=11 // pred_fallthru
          _
      $region12: #{tpu_custom_call.1} parent=5 // pred_fallthru
        _
      %p213 = scmp.lt.s32.totalorder %s19, 2
      // Predicated region
      $region29: #{tpu_custom_call.1} parent=5 // pred_check
        %p214 = pneg %p213
      $region30: #{tpu_custom_call.1} parent=5 // pred_check_branch
        %216 = sbr.rel (%p214) target = $region32
      $region31: #{tpu_custom_call.1} parent=5 // pred_region
        // Predicated region
        $region33: #{tpu_custom_call.1} parent=31 // pred_check
          %p217 = pneg %p39
        $region34: #{tpu_custom_call.1} parent=31 // pred_check_branch
          %219 = sbr.rel (%p217) target = $region36
        $region35: #{tpu_custom_call.1} parent=31 // pred_region
          %s220 = sand.u32 %s29, 1
          %s221 = scalar_lea.sflag [#allocation3], %s220
          %s222 = sand.u32 %s29, 1
          %s223 = smul.addr %s222, 104
          %s224 = scalar_lea.vmem [#allocation2], %s223
          %s225 = smul.u32 13, %s19
          %s226 = ssub.s32 25, %s225
          %p227 = scmp.lt.s32.totalorder %s226, 13
          %s228 = scalar_select %p227, %s226, 13
          %s229 = smul.u32 8, %s228
          %s230 = ssub.s32 104, %s229
          %s231 = sshll.u32 %s230, 4
          %232 = vsyncadd %s221, %s231
          %p233 = scmp.ne.s32.totalorder 0, %s229
          %s234 = smul.addr %s225, 8
          %s235 = scalar_lea.hbm %s0, %s234
          %s236 = smul.u32 8, %s228
          %s237 = sshll.u32 %s235, 4
          %s238 = int_to_ptr.hbm [resolvable:$true] %s237
          %s239 = sshll.u32 %s224, 4
          %s240 = int_to_ptr.vmem [resolvable:$true] %s239
          %s241 = sshll.u32 %s236, 4
          %245 = dma.hbm_to_vmem [thread:$0]  (%p233), %s238, %s241, %s240, %s221, 128, 128, 8
        $region36: #{tpu_custom_call.1} parent=31 // pred_fallthru
          _
      $region32: #{tpu_custom_call.1} parent=5 // pred_fallthru
        _
      %p246 = scmp.le.s32.totalorder 1, %s19
      %p247 = scmp.lt.s32.totalorder %s19, 3
      %p248 = pnand %p246, %p247
      %p249 = pneg %p248
      // Predicated region
      $region37: #{tpu_custom_call.1} parent=5 // pred_check
        _
      $region38: #{tpu_custom_call.1} parent=5 // pred_check_branch
        %251 = sbr.rel (%p248) target = $region40
      $region39: #{tpu_custom_call.1} parent=5 // pred_region
        %s252 = ssub.s32 %s19, 1
        %s253 = sand.u32 %s32, 1
        %s254 = scalar_lea.sflag [#allocation3], %s253
        %s255 = sand.u32 %s32, 1
        %s256 = smul.addr %s255, 104
        %s257 = scalar_lea.vmem [#allocation2], %s256
        // Predicated region
        $region41: #{tpu_custom_call.1} parent=39 // pred_check
          %p258 = pneg %p45
        $region42: #{tpu_custom_call.1} parent=39 // pred_check_branch
          %260 = sbr.rel (%p258) target = $region44
        $region43: #{tpu_custom_call.1} parent=39 // pred_region
          %262 = dma.done %s254, 1664
        $region44: #{tpu_custom_call.1} parent=39 // pred_fallthru
          _
        // Predicated region
        $region45: #{tpu_custom_call.1} parent=39 // pred_check
          %p263 = pneg %p66
        $region46: #{tpu_custom_call.1} parent=39 // pred_check_branch
          %265 = sbr.rel (%p263) target = $region48
        $region47: #{tpu_custom_call.1} parent=39 // pred_region
          %267 = dma.done [#allocation6], 2048
        $region48: #{tpu_custom_call.1} parent=39 // pred_fallthru
          _
        // Predicated region
        $region49: #{tpu_custom_call.1} parent=39 // pred_check
          %p268 = pneg %p87
        $region50: #{tpu_custom_call.1} parent=39 // pred_check_branch
          %270 = sbr.rel (%p268) target = $region52
        $region51: #{tpu_custom_call.1} parent=39 // pred_region
          %272 = dma.done [#allocation6], 32
        $region52: #{tpu_custom_call.1} parent=39 // pred_fallthru
          _
        // Predicated region
        $region53: #{tpu_custom_call.1} parent=39 // pred_check
          %p273 = pneg %p108
        $region54: #{tpu_custom_call.1} parent=39 // pred_check_branch
          %275 = sbr.rel (%p273) target = $region56
        $region55: #{tpu_custom_call.1} parent=39 // pred_region
          %277 = dma.done [#allocation9], 2048
        $region56: #{tpu_custom_call.1} parent=39 // pred_fallthru
          _
        %s278 = sand.u32 %s32, 1
        %s279 = scalar_lea.sflag [#allocation3], %s278
        %s280 = sand.u32 %s32, 1
        %s281 = smul.addr %s280, 104
        %s282 = scalar_lea.vmem [#allocation2], %s281
        %p283 = pneg %p45
        %p284 = pneg %p42
        %p285 = pneg %p66
        %p286 = pneg %p63
        %p287 = pneg %p87
        %p288 = pneg %p84
        %p289 = pneg %p108
        %p290 = pneg %p105
        %p291 = pneg %p129
        %p292 = pneg %p126
        %p293 = pneg %p155
        %p294 = pneg %p152
        %s295 = sand.u32 %s142, 1
        %s296 = scalar_lea.sflag [#allocation4], %s295
        %s297 = sand.u32 %s142, 1
        %s298 = smul.addr %s297, 104
        %s299 = scalar_lea.vmem [#allocation10], %s298
        %s300 = smul.u32 13, %s24
        %s301 = ssub.s32 25, %s300
        %p302 = scmp.lt.s32.totalorder %s301, 13
        %s303 = scalar_select %p302, %s301, 13
        %s304 = smul.u32 8, %s303
        %s305 = smul.u32 13, %s24
        %s306 = ssub.s32 25, %s305
        %p307 = scmp.lt.s32.totalorder %s306, 13
        %s308 = scalar_select %p307, %s306, 13
        %s309 = smul.u32 8, %s308
        %v310 = vld [vmem:[%s257] sm:$0xff]
        %v311 = vld [vmem:[%s257 + $0x8] sm:$0xff]
        %v312 = vld [vmem:[%s257 + $0x10] sm:$0xff]
        %v313 = vld [vmem:[%s257 + $0x18] sm:$0xff]
        %v314 = vld [vmem:[%s257 + $0x20] sm:$0xff]
        %v315 = vld [vmem:[%s257 + $0x28] sm:$0xff]
        %v316 = vld [vmem:[%s257 + $0x30] sm:$0xff]
        %v317 = vld [vmem:[%s257 + $0x38] sm:$0xff]
        %v318 = vld [vmem:[%s257 + $0x40] sm:$0xff]
        %v319 = vld [vmem:[%s257 + $0x48] sm:$0xff]
        %v320 = vld [vmem:[%s257 + $0x50] sm:$0xff]
        %v321 = vld [vmem:[%s257 + $0x58] sm:$0xff]
        %v322 = vld [vmem:[%s257 + $0x60] sm:$0xff]
        %v323 = vpack.c.bf16 %v311, %v310
        %v324 = vpack.c.bf16 %v313, %v312
        %v325 = vpack.c.bf16 %v315, %v314
        %v326 = vpack.c.bf16 %v317, %v316
        %v327 = vpack.c.bf16 %v319, %v318
        %v328 = vpack.c.bf16 %v321, %v320
        %v329 = vpack.c.bf16 %v322, %v322
        %v330 = vld [vmem:[#allocation5] sm:$0xff]
        %v331 = vld [vmem:[#allocation5 + $0x8] sm:$0xff]
        %v332 = vld [vmem:[#allocation5 + $0x10] sm:$0xff]
        %v333 = vld [vmem:[#allocation5 + $0x18] sm:$0xff]
        %v334 = vld [vmem:[#allocation5 + $0x20] sm:$0xff]
        %v335 = vld [vmem:[#allocation5 + $0x28] sm:$0xff]
        %v336 = vld [vmem:[#allocation5 + $0x30] sm:$0xff]
        %v337 = vld [vmem:[#allocation5 + $0x38] sm:$0xff]
        %v338 = vld [vmem:[#allocation5 + $0x40] sm:$0xff]
        %v339 = vld [vmem:[#allocation5 + $0x48] sm:$0xff]
        %v340 = vld [vmem:[#allocation5 + $0x50] sm:$0xff]
        %v341 = vld [vmem:[#allocation5 + $0x58] sm:$0xff]
        %v342 = vld [vmem:[#allocation5 + $0x60] sm:$0xff]
        %v343 = vld [vmem:[#allocation5 + $0x68] sm:$0xff]
        %v344 = vld [vmem:[#allocation5 + $0x70] sm:$0xff]
        %v345 = vld [vmem:[#allocation5 + $0x78] sm:$0xff]
        %v346 = vld [vmem:[#allocation7] sm:$0x3]
        %v348 = vperm.slane %v346, 0
        %v349 = vperm.slane %v346, 1
        %v368 = vunpack.c.l.b16 %v330
        %v369 = vunpack.c.h.b16 %v330
        %v370 = vunpack.c.l.b16 %v331
        %v371 = vunpack.c.h.b16 %v331
        %v372 = vunpack.c.l.b16 %v332
        %v373 = vunpack.c.h.b16 %v332
        %v374 = vunpack.c.l.b16 %v333
        %v375 = vunpack.c.h.b16 %v333
        %v376 = vunpack.c.l.b16 %v334
        %v377 = vunpack.c.h.b16 %v334
        %v378 = vunpack.c.l.b16 %v335
        %v379 = vunpack.c.h.b16 %v335
        %v380 = vunpack.c.l.b16 %v336
        %v381 = vunpack.c.h.b16 %v336
        %v382 = vunpack.c.l.b16 %v337
        %v383 = vunpack.c.h.b16 %v337
        %v384 = vunpack.c.l.b16 %v338
        %v385 = vunpack.c.h.b16 %v338
        %v386 = vunpack.c.l.b16 %v339
        %v387 = vunpack.c.h.b16 %v339
        %v388 = vunpack.c.l.b16 %v340
        %v389 = vunpack.c.h.b16 %v340
        %v390 = vunpack.c.l.b16 %v341
        %v391 = vunpack.c.h.b16 %v341
        %v392 = vunpack.c.l.b16 %v342
        %v393 = vunpack.c.h.b16 %v342
        %v394 = vunpack.c.l.b16 %v343
        %v395 = vunpack.c.h.b16 %v343
        %v396 = vunpack.c.l.b16 %v344
        %v397 = vunpack.c.h.b16 %v344
        %v398 = vunpack.c.l.b16 %v345
        %v399 = vunpack.c.h.b16 %v345
        %v400 = vpack.c.b16 %v370, %v368
        %v401 = vpack.c.b16 %v371, %v369
        %v402 = vpack.c.b16 %v374, %v372
        %v403 = vpack.c.b16 %v375, %v373
        %v404 = vpack.c.b16 %v378, %v376
        %v405 = vpack.c.b16 %v379, %v377
        %v406 = vpack.c.b16 %v382, %v380
        %v407 = vpack.c.b16 %v383, %v381
        %v408 = vpack.c.b16 %v386, %v384
        %v409 = vpack.c.b16 %v387, %v385
        %v410 = vpack.c.b16 %v390, %v388
        %v411 = vpack.c.b16 %v391, %v389
        %v412 = vpack.c.b16 %v394, %v392
        %v413 = vpack.c.b16 %v395, %v393
        %v414 = vpack.c.b16 %v398, %v396
        %v415 = vpack.c.b16 %v399, %v397
        %432 = vmatpush.bf16.msra.mxu0 %v414
        %433 = vmatpush.bf16.msra.mxu0 %v412
        %434 = vmatpush.bf16.msra.mxu0 %v410
        %435 = vmatpush.bf16.msra.mxu0 %v408
        %436 = vmatpush.bf16.msra.mxu0 %v406
        %437 = vmatpush.bf16.msra.mxu0 %v404
        %438 = vmatpush.bf16.msra.mxu0 %v402
        %439 = vmatpush.bf16.msra.mxu0 %v400
        %440 = vmatmul.bf16.gmra.mxu0 %v323
        %v441 = vpop.f32.mrf.mxu0
        %v442 = vadd.f32 %v348, %v441
        %v443 = vpop.f32.mrf.mxu0
        %v444 = vadd.f32 %v348, %v443
        %445 = vmatmul.bf16.gmra.mxu0 %v324
        %v446 = vpop.f32.mrf.mxu0
        %v447 = vadd.f32 %v348, %v446
        %v448 = vpop.f32.mrf.mxu0
        %v449 = vadd.f32 %v348, %v448
        %450 = vmatmul.bf16.gmra.mxu0 %v325
        %v451 = vpop.f32.mrf.mxu0
        %v452 = vadd.f32 %v348, %v451
        %v453 = vpop.f32.mrf.mxu0
        %v454 = vadd.f32 %v348, %v453
        %455 = vmatmul.bf16.gmra.mxu0 %v326
        %v456 = vpop.f32.mrf.mxu0
        %v457 = vadd.f32 %v348, %v456
        %v458 = vpop.f32.mrf.mxu0
        %v459 = vadd.f32 %v348, %v458
        %460 = vmatmul.bf16.gmra.mxu0 %v327
        %v461 = vpop.f32.mrf.mxu0
        %v462 = vadd.f32 %v348, %v461
        %v463 = vpop.f32.mrf.mxu0
        %v464 = vadd.f32 %v348, %v463
        %465 = vmatmul.bf16.gmra.mxu0 %v328
        %v466 = vpop.f32.mrf.mxu0
        %v467 = vadd.f32 %v348, %v466
        %v468 = vpop.f32.mrf.mxu0
        %v469 = vadd.f32 %v348, %v468
        %470 = vmatmul.bf16.gmra.mxu0 %v329
        %v471 = vpop.f32.mrf.mxu0
        %v472 = vadd.f32 %v348, %v471
        %v473 = vpop.f32.mrf.mxu0
        %474 = vdwg.mxu0
        %475 = vmatpush.bf16.msra.mxu0 %v415
        %476 = vmatpush.bf16.msra.mxu0 %v413
        %477 = vmatpush.bf16.msra.mxu0 %v411
        %478 = vmatpush.bf16.msra.mxu0 %v409
        %479 = vmatpush.bf16.msra.mxu0 %v407
        %480 = vmatpush.bf16.msra.mxu0 %v405
        %481 = vmatpush.bf16.msra.mxu0 %v403
        %482 = vmatpush.bf16.msra.mxu0 %v401
        %483 = vmatmul.bf16.gmra.mxu0 %v323
        %v484 = vpop.f32.mrf.mxu0
        %v485 = vadd.f32 %v349, %v484
        %v486 = vpop.f32.mrf.mxu0
        %v487 = vadd.f32 %v349, %v486
        %488 = vmatmul.bf16.gmra.mxu0 %v324
        %v489 = vpop.f32.mrf.mxu0
        %v490 = vadd.f32 %v349, %v489
        %v491 = vpop.f32.mrf.mxu0
        %v492 = vadd.f32 %v349, %v491
        %493 = vmatmul.bf16.gmra.mxu0 %v325
        %v494 = vpop.f32.mrf.mxu0
        %v495 = vadd.f32 %v349, %v494
        %v496 = vpop.f32.mrf.mxu0
        %v497 = vadd.f32 %v349, %v496
        %498 = vmatmul.bf16.gmra.mxu0 %v326
        %v499 = vpop.f32.mrf.mxu0
        %v500 = vadd.f32 %v349, %v499
        %v501 = vpop.f32.mrf.mxu0
        %v502 = vadd.f32 %v349, %v501
        %503 = vmatmul.bf16.gmra.mxu0 %v327
        %v504 = vpop.f32.mrf.mxu0
        %v505 = vadd.f32 %v349, %v504
        %v506 = vpop.f32.mrf.mxu0
        %v507 = vadd.f32 %v349, %v506
        %508 = vmatmul.bf16.gmra.mxu0 %v328
        %v509 = vpop.f32.mrf.mxu0
        %v510 = vadd.f32 %v349, %v509
        %v511 = vpop.f32.mrf.mxu0
        %v512 = vadd.f32 %v349, %v511
        %513 = vmatmul.bf16.gmra.mxu0 %v329
        %v514 = vpop.f32.mrf.mxu0
        %v515 = vadd.f32 %v349, %v514
        %v516 = vpop.f32.mrf.mxu0
        %517 = vdwg.mxu0
        %v518 = vtanh.pop %v442
        %v519 = vtanh.pop %v485
        %v520 = vtanh.pop %v444
        %v521 = vtanh.pop %v487
        %v522 = vtanh.pop %v447
        %v523 = vtanh.pop %v490
        %v524 = vtanh.pop %v449
        %v525 = vtanh.pop %v492
        %v526 = vtanh.pop %v452
        %v527 = vtanh.pop %v495
        %v528 = vtanh.pop %v454
        %v529 = vtanh.pop %v497
        %v530 = vtanh.pop %v457
        %v531 = vtanh.pop %v500
        %v532 = vtanh.pop %v459
        %v533 = vtanh.pop %v502
        %v534 = vtanh.pop %v462
        %v535 = vtanh.pop %v505
        %v536 = vtanh.pop %v464
        %v537 = vtanh.pop %v507
        %v538 = vtanh.pop %v467
        %v539 = vtanh.pop %v510
        %v540 = vtanh.pop %v469
        %v541 = vtanh.pop %v512
        %v542 = vtanh.pop %v472
        %v543 = vtanh.pop %v515
        %v544 = vpack.c.bf16 %v520, %v518
        %v545 = vpack.c.bf16 %v521, %v519
        %v546 = vpack.c.bf16 %v524, %v522
        %v547 = vpack.c.bf16 %v525, %v523
        %v548 = vpack.c.bf16 %v528, %v526
        %v549 = vpack.c.bf16 %v529, %v527
        %v550 = vpack.c.bf16 %v532, %v530
        %v551 = vpack.c.bf16 %v533, %v531
        %v552 = vpack.c.bf16 %v536, %v534
        %v553 = vpack.c.bf16 %v537, %v535
        %v554 = vpack.c.bf16 %v540, %v538
        %v555 = vpack.c.bf16 %v541, %v539
        %v556 = vpack.c.bf16 %v542, %v542
        %v557 = vpack.c.bf16 %v543, %v543
        %v558 = vld [vmem:[#allocation8] sm:$0xf]
        %v559 = vld [vmem:[#allocation8 + $0x4] sm:$0xf]
        %v560 = vld [vmem:[#allocation8 + $0x8] sm:$0xf]
        %v561 = vld [vmem:[#allocation8 + $0xc] sm:$0xf]
        %v562 = vld [vmem:[#allocation8 + $0x10] sm:$0xf]
        %v563 = vld [vmem:[#allocation8 + $0x14] sm:$0xf]
        %v564 = vld [vmem:[#allocation8 + $0x18] sm:$0xf]
        %v565 = vld [vmem:[#allocation8 + $0x1c] sm:$0xf]
        %v566 = vld [vmem:[#allocation8 + $0x20] sm:$0xf]
        %v567 = vld [vmem:[#allocation8 + $0x24] sm:$0xf]
        %v568 = vld [vmem:[#allocation8 + $0x28] sm:$0xf]
        %v569 = vld [vmem:[#allocation8 + $0x2c] sm:$0xf]
        %v570 = vld [vmem:[#allocation8 + $0x30] sm:$0xf]
        %v571 = vld [vmem:[#allocation8 + $0x34] sm:$0xf]
        %v572 = vld [vmem:[#allocation8 + $0x38] sm:$0xf]
        %v573 = vld [vmem:[#allocation8 + $0x3c] sm:$0xf]
        %v574 = vld [vmem:[#allocation8 + $0x40] sm:$0xf]
        %v575 = vld [vmem:[#allocation8 + $0x44] sm:$0xf]
        %v576 = vld [vmem:[#allocation8 + $0x48] sm:$0xf]
        %v577 = vld [vmem:[#allocation8 + $0x4c] sm:$0xf]
        %v578 = vld [vmem:[#allocation8 + $0x50] sm:$0xf]
        %v579 = vld [vmem:[#allocation8 + $0x54] sm:$0xf]
        %v580 = vld [vmem:[#allocation8 + $0x58] sm:$0xf]
        %v581 = vld [vmem:[#allocation8 + $0x5c] sm:$0xf]
        %v582 = vld [vmem:[#allocation8 + $0x60] sm:$0xf]
        %v583 = vld [vmem:[#allocation8 + $0x64] sm:$0xf]
        %v584 = vld [vmem:[#allocation8 + $0x68] sm:$0xf]
        %v585 = vld [vmem:[#allocation8 + $0x6c] sm:$0xf]
        %v586 = vld [vmem:[#allocation8 + $0x70] sm:$0xf]
        %v587 = vld [vmem:[#allocation8 + $0x74] sm:$0xf]
        %v588 = vld [vmem:[#allocation8 + $0x78] sm:$0xf]
        %v589 = vld [vmem:[#allocation8 + $0x7c] sm:$0xf]
        %v590 = vld [vmem:[%s4] sm:$0x1]
        %v592 = vperm.slane %v590, 0
        %v626 = vunpack.c.l.b16 %v558
        %v627 = vunpack.c.l.b16 %v559
        %v628 = vunpack.c.l.b16 %v560
        %v629 = vunpack.c.l.b16 %v561
        %v630 = vunpack.c.l.b16 %v562
        %v631 = vunpack.c.l.b16 %v563
        %v632 = vunpack.c.l.b16 %v564
        %v633 = vunpack.c.l.b16 %v565
        %v634 = vunpack.c.l.b16 %v566
        %v635 = vunpack.c.l.b16 %v567
        %v636 = vunpack.c.l.b16 %v568
        %v637 = vunpack.c.l.b16 %v569
        %v638 = vunpack.c.l.b16 %v570
        %v639 = vunpack.c.l.b16 %v571
        %v640 = vunpack.c.l.b16 %v572
        %v641 = vunpack.c.l.b16 %v573
        %v642 = vunpack.c.l.b16 %v574
        %v643 = vunpack.c.l.b16 %v575
        %v644 = vunpack.c.l.b16 %v576
        %v645 = vunpack.c.l.b16 %v577
        %v646 = vunpack.c.l.b16 %v578
        %v647 = vunpack.c.l.b16 %v579
        %v648 = vunpack.c.l.b16 %v580
        %v649 = vunpack.c.l.b16 %v581
        %v650 = vunpack.c.l.b16 %v582
        %v651 = vunpack.c.l.b16 %v583
        %v652 = vunpack.c.l.b16 %v584
        %v653 = vunpack.c.l.b16 %v585
        %v654 = vunpack.c.l.b16 %v586
        %v655 = vunpack.c.l.b16 %v587
        %v656 = vunpack.c.l.b16 %v588
        %v657 = vunpack.c.l.b16 %v589
        %v658 = vpack.c.b16 %v627, %v626
        %v659 = vpack.c.b16 %v629, %v628
        %v660 = vpack.c.b16 %v631, %v630
        %v661 = vpack.c.b16 %v633, %v632
        %v662 = vpack.c.b16 %v635, %v634
        %v663 = vpack.c.b16 %v637, %v636
        %v664 = vpack.c.b16 %v639, %v638
        %v665 = vpack.c.b16 %v641, %v640
        %v666 = vpack.c.b16 %v643, %v642
        %v667 = vpack.c.b16 %v645, %v644
        %v668 = vpack.c.b16 %v647, %v646
        %v669 = vpack.c.b16 %v649, %v648
        %v670 = vpack.c.b16 %v651, %v650
        %v671 = vpack.c.b16 %v653, %v652
        %v672 = vpack.c.b16 %v655, %v654
        %v673 = vpack.c.b16 %v657, %v656
        %690 = vmatpush.bf16.msra.mxu0 %v665
        %691 = vmatpush.bf16.msra.mxu0 %v664
        %692 = vmatpush.bf16.msra.mxu0 %v663
        %693 = vmatpush.bf16.msra.mxu0 %v662
        %694 = vmatpush.bf16.msra.mxu0 %v661
        %695 = vmatpush.bf16.msra.mxu0 %v660
        %696 = vmatpush.bf16.msra.mxu0 %v659
        %697 = vmatpush.bf16.msra.mxu0 %v658
        %698 = vmatmul.bf16.gmra.mxu0 %v544
        %v699 = vpop.f32.mrf.mxu0
        %v700 = vadd.f32 %v592, %v699
        %v701 = vpop.f32.mrf.mxu0
        %v702 = vadd.f32 %v592, %v701
        %703 = vmatmul.bf16.gmra.mxu0 %v546
        %v704 = vpop.f32.mrf.mxu0
        %v705 = vadd.f32 %v592, %v704
        %v706 = vpop.f32.mrf.mxu0
        %v707 = vadd.f32 %v592, %v706
        %708 = vmatmul.bf16.gmra.mxu0 %v548
        %v709 = vpop.f32.mrf.mxu0
        %v710 = vadd.f32 %v592, %v709
        %v711 = vpop.f32.mrf.mxu0
        %v712 = vadd.f32 %v592, %v711
        %713 = vmatmul.bf16.gmra.mxu0 %v550
        %v714 = vpop.f32.mrf.mxu0
        %v715 = vadd.f32 %v592, %v714
        %v716 = vpop.f32.mrf.mxu0
        %v717 = vadd.f32 %v592, %v716
        %718 = vmatmul.bf16.gmra.mxu0 %v552
        %v719 = vpop.f32.mrf.mxu0
        %v720 = vadd.f32 %v592, %v719
        %v721 = vpop.f32.mrf.mxu0
        %v722 = vadd.f32 %v592, %v721
        %723 = vmatmul.bf16.gmra.mxu0 %v554
        %v724 = vpop.f32.mrf.mxu0
        %v725 = vadd.f32 %v592, %v724
        %v726 = vpop.f32.mrf.mxu0
        %v727 = vadd.f32 %v592, %v726
        %728 = vmatmul.bf16.gmra.mxu0 %v556
        %v729 = vpop.f32.mrf.mxu0
        %v730 = vadd.f32 %v592, %v729
        %v731 = vpop.f32.mrf.mxu0
        %732 = vdwg.mxu0
        %733 = vmatpush.bf16.msra.mxu0 %v673
        %734 = vmatpush.bf16.msra.mxu0 %v672
        %735 = vmatpush.bf16.msra.mxu0 %v671
        %736 = vmatpush.bf16.msra.mxu0 %v670
        %737 = vmatpush.bf16.msra.mxu0 %v669
        %738 = vmatpush.bf16.msra.mxu0 %v668
        %739 = vmatpush.bf16.msra.mxu0 %v667
        %740 = vmatpush.bf16.msra.mxu0 %v666
        %741 = vmatmul.bf16.gmra.mxu0 %v545
        %v742 = vpop.f32.mrf.mxu0
        %v743 = vadd.f32 %v700, %v742
        %v744 = vpop.f32.mrf.mxu0
        %v745 = vadd.f32 %v702, %v744
        %746 = vmatmul.bf16.gmra.mxu0 %v547
        %v747 = vpop.f32.mrf.mxu0
        %v748 = vadd.f32 %v705, %v747
        %v749 = vpop.f32.mrf.mxu0
        %v750 = vadd.f32 %v707, %v749
        %751 = vmatmul.bf16.gmra.mxu0 %v549
        %v752 = vpop.f32.mrf.mxu0
        %v753 = vadd.f32 %v710, %v752
        %v754 = vpop.f32.mrf.mxu0
        %v755 = vadd.f32 %v712, %v754
        %756 = vmatmul.bf16.gmra.mxu0 %v551
        %v757 = vpop.f32.mrf.mxu0
        %v758 = vadd.f32 %v715, %v757
        %v759 = vpop.f32.mrf.mxu0
        %v760 = vadd.f32 %v717, %v759
        %761 = vmatmul.bf16.gmra.mxu0 %v553
        %v762 = vpop.f32.mrf.mxu0
        %v763 = vadd.f32 %v720, %v762
        %v764 = vpop.f32.mrf.mxu0
        %v765 = vadd.f32 %v722, %v764
        %766 = vmatmul.bf16.gmra.mxu0 %v555
        %v767 = vpop.f32.mrf.mxu0
        %v768 = vadd.f32 %v725, %v767
        %v769 = vpop.f32.mrf.mxu0
        %v770 = vadd.f32 %v727, %v769
        %771 = vmatmul.bf16.gmra.mxu0 %v557
        %v772 = vpop.f32.mrf.mxu0
        %v773 = vadd.f32 %v730, %v772
        %v774 = vpop.f32.mrf.mxu0
        %775 = vdwg.mxu0
        %776 = vst [vmem:[%s299] sm:$0xff] %v743
        %777 = vst [vmem:[%s299 + $0x8] sm:$0xff] %v745
        %778 = vst [vmem:[%s299 + $0x10] sm:$0xff] %v748
        %779 = vst [vmem:[%s299 + $0x18] sm:$0xff] %v750
        %780 = vst [vmem:[%s299 + $0x20] sm:$0xff] %v753
        %781 = vst [vmem:[%s299 + $0x28] sm:$0xff] %v755
        %782 = vst [vmem:[%s299 + $0x30] sm:$0xff] %v758
        %783 = vst [vmem:[%s299 + $0x38] sm:$0xff] %v760
        %784 = vst [vmem:[%s299 + $0x40] sm:$0xff] %v763
        %785 = vst [vmem:[%s299 + $0x48] sm:$0xff] %v765
        %786 = vst [vmem:[%s299 + $0x50] sm:$0xff] %v768
        %787 = vst [vmem:[%s299 + $0x58] sm:$0xff] %v770
        %788 = vst [vmem:[%s299 + $0x60] sm:$0xff] %v773
        %s789 = sand.u32 %s142, 1
        %s790 = scalar_lea.sflag [#allocation4], %s789
        %s791 = sand.u32 %s142, 1
        %s792 = smul.addr %s791, 104
        %s793 = scalar_lea.vmem [#allocation10], %s792
        // Predicated region
        $region57: #{tpu_custom_call.1} parent=39 // pred_check
          %p794 = pneg %p152
        $region58: #{tpu_custom_call.1} parent=39 // pred_check_branch
          %796 = sbr.rel (%p794) target = $region60
        $region59: #{tpu_custom_call.1} parent=39 // pred_region
          %s797 = smul.u32 13, %s24
          %s798 = ssub.s32 25, %s797
          %p799 = scmp.lt.s32.totalorder %s798, 13
          %s800 = scalar_select %p799, %s798, 13
          %s801 = smul.u32 8, %s800
          %s802 = ssub.s32 104, %s801
          %s803 = sshll.u32 %s802, 4
          %804 = vsyncadd %s790, %s803
          %p805 = scmp.ne.s32.totalorder 0, %s801
          %s806 = smul.addr %s797, 8
          %s807 = scalar_lea.hbm %s5, %s806
          %s808 = smul.u32 8, %s800
          %s809 = sshll.u32 %s793, 4
          %s810 = int_to_ptr.vmem [resolvable:$true] %s809
          %s811 = sshll.u32 %s807, 4
          %s812 = int_to_ptr.hbm [resolvable:$true] %s811
          %s813 = sshll.u32 %s808, 4
          %817 = dma.vmem_to_hbm [thread:$0]  (%p805), %s810, %s813, %s812, %s790, 128, 128, 8
        $region60: #{tpu_custom_call.1} parent=39 // pred_fallthru
          _
      $region40: #{tpu_custom_call.1} parent=5 // pred_fallthru
        _
      %p818 = scmp.le.s32.totalorder 2, %s19
      // Predicated region
      $region61: #{tpu_custom_call.1} parent=5 // pred_check
        %p819 = pneg %p818
      $region62: #{tpu_custom_call.1} parent=5 // pred_check_branch
        %821 = sbr.rel (%p819) target = $region64
      $region63: #{tpu_custom_call.1} parent=5 // pred_region
        %s822 = ssub.s32 %s19, 2
        // Predicated region
        $region65: #{tpu_custom_call.1} parent=63 // pred_check
          %p823 = pneg %p158
        $region66: #{tpu_custom_call.1} parent=63 // pred_check_branch
          %825 = sbr.rel (%p823) target = $region68
        $region67: #{tpu_custom_call.1} parent=63 // pred_region
          %s826 = sand.u32 %s143, 1
          %s827 = scalar_lea.sflag [#allocation4], %s826
          %s828 = sand.u32 %s143, 1
          %s829 = smul.addr %s828, 104
          %s830 = scalar_lea.vmem [#allocation10], %s829
          %832 = dma.done %s827, 1664
        $region68: #{tpu_custom_call.1} parent=63 // pred_fallthru
          _
      $region64: #{tpu_custom_call.1} parent=5 // pred_fallthru
        _
    $region6: #{tpu_custom_call.1} parent=1 // loop_footer
      %s23 = sadd.s32 1, %s19
    $region7: #{tpu_custom_call.1} parent=1 // loop_footer_branch
      %18 = sbr.rel target = $region3
    $region8: #{tpu_custom_call.1} parent=1 // loop_exit
      _
    %833 = vsyncpa [#allocation3], 1
    %s834 = scalar_lea.sflag [#allocation3], 1
    %835 = vsyncpa %s834, 1
    %836 = vsyncpa [#allocation6], 1
    %837 = vsyncpa [#allocation9], 1
    %838 = vsyncpa [#allocation4], 1
    %s839 = scalar_lea.sflag [#allocation4], 1
    %840 = vsyncpa %s839, 1

</llo_original>
